<compile_context>
chip_gen: v6e
topology: v6e:2x2x1
jax: 0.10.0
libtpu: 0.0.40
codegen_flags: <defaults>
</compile_context>

<pallas_src>
import functools

import jax
import jax.numpy as jnp
from jax.experimental import pallas as pl
from jax.experimental.pallas import tpu as pltpu

C_SI = 299792458.0  # speed of light [m/s]


# --------------------------------------------------------------------------
# Kernel: per-frequency fused transfer function * reference spectrum.
#   H(w) = T * exp(-w*K_sum/c) * [cos(w*Phi_sum/c) - i*sin(w*Phi_sum/c)]
#   Y(w) = spec(w) * H(w)
# One grid step processes `bt` candidates (static unrolled loop).  omega and
# the spectrum are sublane-dense (rows, 128) tiles resident across all steps;
# per-candidate scalars live in one flat SMEM array.
# --------------------------------------------------------------------------
def _transfer_kernel(scal_ref, omega_ref, sre_ref, sim_ref, y_ref, *, bt):
    g = pl.program_id(0)
    omega = omega_ref[...]                       # (rows, 128) f32
    s_re = sre_ref[...]                          # reference spectrum re
    s_im = sim_ref[...]                          # reference spectrum im

    for bi in range(bt):                         # static unroll (bt <= 8)
        b = g * bt + bi
        k_over_c = scal_ref[4 * b + 0]           # sum_l k_l D_l / c
        neg_phi_over_c = scal_ref[4 * b + 1]     # -sum_l (n_l-1) D_l / c
        t_re = scal_ref[4 * b + 2]               # prod_l Fresnel t_l (re)
        t_im = scal_ref[4 * b + 3]               # prod_l Fresnel t_l (im)

        amp = jnp.exp(-omega * k_over_c)         # attenuation (EUP)
        ang = omega * neg_phi_over_c             # physical delay (rfft e^{-iwt})
        p_re = amp * jnp.cos(ang)
        p_im = amp * jnp.sin(ang)

        h_re = t_re * p_re - t_im * p_im
        h_im = t_re * p_im + t_im * p_re

        # Fused spectrum multiply: Y = spec * H (VALU work rides free).
        y_ref[bi, 0] = s_re * h_re - s_im * h_im
        y_ref[bi, 1] = s_re * h_im + s_im * h_re


def fused_transfer(omega_tiles, spec_re, spec_im, scal_flat, n_groups, bt):
    """Returns (n_groups*bt, 2, rows, 128) f32 = stacked re/im of spec*H."""
    rows, lanes = omega_tiles.shape
    smem = pl.BlockSpec(memory_space=pltpu.MemorySpace.SMEM)
    kernel = functools.partial(_transfer_kernel, bt=bt)
    return pl.pallas_call(
        kernel,
        out_shape=jax.ShapeDtypeStruct((n_groups * bt, 2, rows, lanes),
                                       jnp.float32),
        grid=(n_groups,),
        in_specs=[
            smem,                                            # packed scalars
            pl.BlockSpec((rows, lanes), lambda g: (0, 0)),   # omega (resident)
            pl.BlockSpec((rows, lanes), lambda g: (0, 0)),   # spec re (resident)
            pl.BlockSpec((rows, lanes), lambda g: (0, 0)),   # spec im (resident)
        ],
        out_specs=pl.BlockSpec((bt, 2, rows, lanes), lambda g: (g, 0, 0, 0)),
        compiler_params=pltpu.CompilerParams(
            dimension_semantics=("parallel",)),
    )(scal_flat, omega_tiles, spec_re, spec_im)


# --------------------------------------------------------------------------
# Loss: alpha * sqrt(MSE).  Tiny reduction -> plain jnp (XLA fuses it).
# --------------------------------------------------------------------------
def rmse_loss(y_simulated, y_exp, alpha):
    diff = y_simulated - y_exp
    return alpha * jnp.sqrt(jnp.mean(diff * diff))


# --------------------------------------------------------------------------
# forward(): mirrors LayeredExtractor.forward().  Batched over B candidate
# parameter sets (B=1 reproduces the module semantics).
# --------------------------------------------------------------------------
def layered_extractor_forward_batched(reference_pulse, deltat,
                                      n_params, k_params, log_D_params):
    """n/k/log_D params: (B, L).  Returns (B, len(reference_pulse))."""
    n = n_params.astype(jnp.float32)
    k = k_params.astype(jnp.float32)
    d = jnp.exp(log_D_params).astype(jnp.float32)       # D = exp(log_D)
    batch = n.shape[0]

    n_time = reference_pulse.shape[0]
    n_freq = n_time // 2 + 1

    # TODO(synk): FFT/IFFT done in plain JAX (no Pallas FFT primitive).
    spec = jnp.fft.rfft(reference_pulse.astype(jnp.float32))       # (n_freq,) c64
    freqs = jnp.arange(n_freq, dtype=jnp.float32) / (n_time * deltat)
    omega = (2.0 * jnp.pi * freqs).astype(jnp.float32)

    # Sublane-dense layout: pad to multiple of 8*128 and tile as (rows, 128).
    f_pad = ((n_freq + 1023) // 1024) * 1024
    rows = f_pad // 128

    def tile(v):
        return (jnp.zeros((f_pad,), jnp.float32).at[:n_freq].set(v)
                .reshape(rows, 128))

    omega_tiles = tile(omega)
    spec_re = tile(jnp.real(spec).astype(jnp.float32))
    spec_im = tile(jnp.imag(spec).astype(jnp.float32))

    # Algebraic collapse of the layer product (exact), pre-divided by c:
    k_over_c = jnp.sum(k * d, axis=-1) / C_SI                       # (B,)
    neg_phi_over_c = -jnp.sum((n - 1.0) * d, axis=-1) / C_SI        # (B,)
    # Fresnel transmission (air -> layer -> air) at normal incidence,
    # t_l = 4 n~ / (1 + n~)^2 ; product over layers is a scalar complex.
    n_c = n + 1j * k
    t_prod = jnp.prod(4.0 * n_c / (1.0 + n_c) ** 2, axis=-1)        # (B,) c64
    t_re = jnp.real(t_prod).astype(jnp.float32)
    t_im = jnp.imag(t_prod).astype(jnp.float32)

    # Batch blocking: bt candidates per grid step, capped by code size (8)
    # and by VMEM (per-step output block kept to a few MiB, double-buffered).
    per_cand_bytes = 2 * rows * 128 * 4
    bt = max(1, min(batch, 8, (4 << 20) // per_cand_bytes))
    n_groups = -(-batch // bt)
    b_pad = n_groups * bt

    def pad(v, fill=0.0):
        return jnp.pad(v, (0, b_pad - batch), constant_values=fill)

    # Packed flat SMEM scalars: [k/c, -phi/c, t_re, t_im] per candidate.
    scal_flat = jnp.stack(
        [pad(k_over_c), pad(neg_phi_over_c), pad(t_re, 1.0), pad(t_im)],
        axis=-1).reshape(-1).astype(jnp.float32)

    y = fused_transfer(omega_tiles, spec_re, spec_im, scal_flat, n_groups, bt)
    y_flat = y[:batch].reshape(batch, 2, f_pad)
    # Padded lanes hold Y = 0 (spec padded with 0): the explicit slice below
    # keeps the irfft exact regardless.
    Y = (y_flat[:, 0, :n_freq] + 1j * y_flat[:, 1, :n_freq]).astype(spec.dtype)

    y_simulated = jnp.fft.irfft(Y, n=n_time, axis=-1)
    return y_simulated[:, :n_time]     # y_simulated[:len(reference_pulse)]


def layered_extractor_forward(reference_pulse, deltat, n_params, k_params,
                              log_D_params):
    y = layered_extractor_forward_batched(
        reference_pulse, deltat,
        n_params[None, :], k_params[None, :], log_D_params[None, :])
    return y[0]


# --------------------------------------------------------------------------
# Driver
# --------------------------------------------------------------------------
if __name__ == "__main__":
    key = jax.random.PRNGKey(0)
    k_ref, k_exp = jax.random.split(key)

    # --- deterministic small inputs ------------------------------------
    N = 256                      # pulse length
    deltat = 5.0e-14             # 50 fs sampling step

    t = jnp.arange(N, dtype=jnp.float32) * deltat
    t0 = N * deltat / 3.0
    sigma = 3.0e-13
    # single-cycle THz-like reference pulse (derivative of a Gaussian) + tiny noise
    reference_pulse = (-(t - t0) / sigma) * jnp.exp(-((t - t0) / sigma) ** 2)
    reference_pulse = reference_pulse + 1e-3 * jax.random.normal(k_ref, (N,))
    reference_pulse = reference_pulse.astype(jnp.float32)

    # layers_init = [(n + i*k, D), ...]  -> 2 layers, deterministic values
    n_params = jnp.array([1.90, 2.60], dtype=jnp.float32)      # real(n~)
    k_params = jnp.array([0.05, 0.02], dtype=jnp.float32)      # imag(n~)
    D_init = jnp.array([5.0e-4, 2.0e-4], dtype=jnp.float32)    # thickness [m]
    log_D_params = jnp.log(D_init)

    fwd = jax.jit(layered_extractor_forward)
    fwd_batched = jax.jit(layered_extractor_forward_batched)

    # synthetic "experimental" pulse: slightly perturbed params + noise
    y_exp = fwd(reference_pulse, deltat,
                n_params + 0.05, k_params + 0.005, jnp.log(D_init * 1.02))
    y_exp = (y_exp + 1e-3 * jax.random.normal(k_exp, (N,))).astype(jnp.float32)

    # --- forward pass (B = 1, module semantics) -------------------------
    y_simulated = fwd(reference_pulse, deltat, n_params, k_params, log_D_params)
    y_simulated = jax.block_until_ready(y_simulated)
    assert y_simulated.shape == (N,)
    assert bool(jnp.all(jnp.isfinite(y_simulated)))

    # --- loss (plain jnp), alpha = 1 -------------------------------------
    loss = jax.block_until_ready(rmse_loss(y_simulated, y_exp, alpha=1.0))
    assert bool(jnp.isfinite(loss))

    # --- batched forward (B = 4 candidates, ONE grid step in the kernel) --
    B = 4
    offs = jnp.linspace(0.0, 0.15, B, dtype=jnp.float32)[:, None]
    n_b = n_params[None, :] + offs
    k_b = jnp.broadcast_to(k_params, (B, 2))
    d_b = jnp.broadcast_to(log_D_params, (B, 2))
    y_batch = fwd_batched(reference_pulse, deltat, n_b, k_b, d_b)
    y_batch = jax.block_until_ready(y_batch)
    assert y_batch.shape == (B, N)
    assert bool(jnp.all(jnp.isfinite(y_batch)))

    # batched and single-candidate paths must agree (row 0 has zero offset)
    assert bool(jnp.allclose(y_batch[0], y_simulated, atol=1e-5, rtol=1e-5))

    print("KERNEL_OK")
</pallas_src>

<mosaic_0001>
module attributes {stable_mosaic.version = 11 : i64} {
  func.func @_transfer_kernel(%arg0: i32, %arg1: memref<4xf32, #tpu.memory_space<smem>>, %arg2: memref<8x128xf32, #tpu.memory_space<vmem>>, %arg3: memref<8x128xf32, #tpu.memory_space<vmem>>, %arg4: memref<8x128xf32, #tpu.memory_space<vmem>>, %arg5: memref<1x2x8x128xf32, #tpu.memory_space<vmem>>) attributes {dimension_semantics = [#tpu.dimension_semantics<parallel>], iteration_bounds = array<i64: 1>, scalar_prefetch = 0 : i64, scratch_operands = 0 : i64, tpu.core_type = #tpu.core_type<tc>, window_params = [{transform_indices = @transform_0, window_bounds = array<i64: 4>}, {pipeline_mode = #tpu.pipeline_mode<synchronous>, transform_indices = @transform_1, window_bounds = array<i64: 8, 128>}, {pipeline_mode = #tpu.pipeline_mode<synchronous>, transform_indices = @transform_2, window_bounds = array<i64: 8, 128>}, {pipeline_mode = #tpu.pipeline_mode<synchronous>, transform_indices = @transform_3, window_bounds = array<i64: 8, 128>}, {transform_indices = @transform_4, window_bounds = array<i64: 1, 2, 8, 128>}]} {
    %c0 = arith.constant 0 : index
    %c0_0 = arith.constant 0 : index
    %0 = vector.load %arg2[%c0, %c0_0] : memref<8x128xf32, #tpu.memory_space<vmem>>, vector<8x128xf32>
    %c0_1 = arith.constant 0 : index
    %c0_2 = arith.constant 0 : index
    %1 = vector.load %arg3[%c0_1, %c0_2] : memref<8x128xf32, #tpu.memory_space<vmem>>, vector<8x128xf32>
    %c0_3 = arith.constant 0 : index
    %c0_4 = arith.constant 0 : index
    %2 = vector.load %arg4[%c0_3, %c0_4] : memref<8x128xf32, #tpu.memory_space<vmem>>, vector<8x128xf32>
    %c1_i32 = arith.constant 1 : i32
    %3 = arith.muli %arg0, %c1_i32 : i32
    %c0_i32 = arith.constant 0 : i32
    %4 = arith.addi %3, %c0_i32 : i32
    %c4_i32 = arith.constant 4 : i32
    %5 = arith.muli %c4_i32, %4 : i32
    %c0_i32_5 = arith.constant 0 : i32
    %6 = arith.addi %5, %c0_i32_5 : i32
    %7 = arith.index_cast %6 : i32 to index
    %8 = memref.load %arg1[%7] : memref<4xf32, #tpu.memory_space<smem>>
    %c4_i32_6 = arith.constant 4 : i32
    %9 = arith.muli %c4_i32_6, %4 : i32
    %c1_i32_7 = arith.constant 1 : i32
    %10 = arith.addi %9, %c1_i32_7 : i32
    %11 = arith.index_cast %10 : i32 to index
    %12 = memref.load %arg1[%11] : memref<4xf32, #tpu.memory_space<smem>>
    %c4_i32_8 = arith.constant 4 : i32
    %13 = arith.muli %c4_i32_8, %4 : i32
    %c2_i32 = arith.constant 2 : i32
    %14 = arith.addi %13, %c2_i32 : i32
    %15 = arith.index_cast %14 : i32 to index
    %16 = memref.load %arg1[%15] : memref<4xf32, #tpu.memory_space<smem>>
    %c4_i32_9 = arith.constant 4 : i32
    %17 = arith.muli %c4_i32_9, %4 : i32
    %c3_i32 = arith.constant 3 : i32
    %18 = arith.addi %17, %c3_i32 : i32
    %19 = arith.index_cast %18 : i32 to index
    %20 = memref.load %arg1[%19] : memref<4xf32, #tpu.memory_space<smem>>
    %cst = arith.constant 0.000000e+00 : f32
    %21 = vector.broadcast %cst : f32 to vector<8x128xf32>
    %22 = arith.subf %21, %0 : vector<8x128xf32>
    %23 = vector.broadcast %8 : f32 to vector<8x128xf32>
    %24 = arith.mulf %22, %23 : vector<8x128xf32>
    %25 = math.exp %24 : vector<8x128xf32>
    %26 = vector.broadcast %12 : f32 to vector<8x128xf32>
    %27 = arith.mulf %0, %26 : vector<8x128xf32>
    %28 = math.cos %27 : vector<8x128xf32>
    %29 = arith.mulf %25, %28 : vector<8x128xf32>
    %30 = math.sin %27 : vector<8x128xf32>
    %31 = arith.mulf %25, %30 : vector<8x128xf32>
    %32 = vector.broadcast %16 : f32 to vector<8x128xf32>
    %33 = arith.mulf %32, %29 : vector<8x128xf32>
    %34 = vector.broadcast %20 : f32 to vector<8x128xf32>
    %35 = arith.mulf %34, %31 : vector<8x128xf32>
    %36 = arith.subf %33, %35 : vector<8x128xf32>
    %37 = vector.broadcast %16 : f32 to vector<8x128xf32>
    %38 = arith.mulf %37, %31 : vector<8x128xf32>
    %39 = vector.broadcast %20 : f32 to vector<8x128xf32>
    %40 = arith.mulf %39, %29 : vector<8x128xf32>
    %41 = arith.addf %38, %40 : vector<8x128xf32>
    %42 = arith.mulf %1, %36 : vector<8x128xf32>
    %43 = arith.mulf %2, %41 : vector<8x128xf32>
    %44 = arith.subf %42, %43 : vector<8x128xf32>
    %c0_10 = arith.constant 0 : index
    %c0_11 = arith.constant 0 : index
    %c0_12 = arith.constant 0 : index
    %c0_13 = arith.constant 0 : index
    %45 = vector.load %arg5[%c0_10, %c0_11, %c0_12, %c0_13] : memref<1x2x8x128xf32, #tpu.memory_space<vmem>>, vector<1x1x8x128xf32>
    %46 = vector.shape_cast %45 : vector<1x1x8x128xf32> to vector<8x128xf32>
    %47 = vector.shape_cast %44 : vector<8x128xf32> to vector<1x1x8x128xf32>
    tpu.vector_store %arg5[%c0_10, %c0_11, %c0_12, %c0_13], %47 {strides = array<i32>} : memref<1x2x8x128xf32, #tpu.memory_space<vmem>>, vector<1x1x8x128xf32>,
    %48 = arith.mulf %1, %41 : vector<8x128xf32>
    %49 = arith.mulf %2, %36 : vector<8x128xf32>
    %50 = arith.addf %48, %49 : vector<8x128xf32>
    %c0_14 = arith.constant 0 : index
    %c1 = arith.constant 1 : index
    %c0_15 = arith.constant 0 : index
    %c0_16 = arith.constant 0 : index
    %51 = vector.load %arg5[%c0_14, %c1, %c0_15, %c0_16] : memref<1x2x8x128xf32, #tpu.memory_space<vmem>>, vector<1x1x8x128xf32>
    %52 = vector.shape_cast %51 : vector<1x1x8x128xf32> to vector<8x128xf32>
    %53 = vector.shape_cast %50 : vector<8x128xf32> to vector<1x1x8x128xf32>
    tpu.vector_store %arg5[%c0_14, %c1, %c0_15, %c0_16], %53 {strides = array<i32>} : memref<1x2x8x128xf32, #tpu.memory_space<vmem>>, vector<1x1x8x128xf32>,
    return
  }
  func.func @transform_0(%arg0: i32) -> i32 {
    %c0_i32 = arith.constant 0 : i32
    %c0_i32_0 = arith.constant 0 : i32
    return %c0_i32 : i32
  }
  func.func @transform_1(%arg0: i32) -> (i32, i32) {
    %c0_i32 = arith.constant 0 : i32
    %c0_i32_0 = arith.constant 0 : i32
    %c0_i32_1 = arith.constant 0 : i32
    return %c0_i32, %c0_i32_0 : i32, i32
  }
  func.func @transform_2(%arg0: i32) -> (i32, i32) {
    %c0_i32 = arith.constant 0 : i32
    %c0_i32_0 = arith.constant 0 : i32
    %c0_i32_1 = arith.constant 0 : i32
    return %c0_i32, %c0_i32_0 : i32, i32
  }
  func.func @transform_3(%arg0: i32) -> (i32, i32) {
    %c0_i32 = arith.constant 0 : i32
    %c0_i32_0 = arith.constant 0 : i32
    %c0_i32_1 = arith.constant 0 : i32
    return %c0_i32, %c0_i32_0 : i32, i32
  }
  func.func @transform_4(%arg0: i32) -> (i32, i32, i32, i32) {
    %c0_i32 = arith.constant 0 : i32
    %c0_i32_0 = arith.constant 0 : i32
    %c0_i32_1 = arith.constant 0 : i32
    %c0_i32_2 = arith.constant 0 : i32
    return %arg0, %c0_i32, %c0_i32_0, %c0_i32_1 : i32, i32, i32, i32
  }
}

</mosaic_0001>

<llo_original>
// kernel: reverse.0
$region0: #{reverse.0}
  %s0 = inlined_call_operand.vmem [shape: f32[1,127], index: 0, kind: input, shape index: {}]
  %s1 = inlined_call_operand.vmem [shape: f32[1,127], index: 1, kind: output, shape index: {}]
  %v2 = vlaneseq
  %v3 = vsub.s32 126, %v2
  %4 = vset.pattern.permute.xlu0 %v3
  $region1: #{reverse.0} parent=0
    #allocation0 [shape = 'u8[4096]{0}', space=vmem, size = 0x1000, scoped, tag = 'operand span for operand 0']
    #allocation1 [shape = 'u8[512]{0}', space=vmem, size = 0x400, scoped, tag = 'packed  for operand 0']
    #allocation2 [shape = 'u8[4096]{0}', space=vmem, size = 0x1000, scoped, tag = 'operand span for operand 1']
    #allocation3 [shape = 'u8[512]{0}', space=vmem, size = 0x400, scoped, tag = 'packed  for operand 1']
    // Predicated region
    $region2: #{reverse.0} parent=1 // pred_check
      _
    $region3: #{reverse.0} parent=1 // pred_check_branch
      %6 = sbr.rel (0) target = $region5
    $region4: #{reverse.0} parent=1 // pred_region
      // Predicated region
      $region6: #{reverse.0} parent=4 // pred_check
        _
      $region7: #{reverse.0} parent=4 // pred_check_branch
        %8 = sbr.rel target = $region9
      $region8: #{reverse.0} parent=4 // pred_region
        // Predicated region
        $region21: #{reverse.0} parent=8 // pred_check
          _
        $region22: #{reverse.0} parent=8 // pred_check_branch
          %24 = sbr.rel (0) target = $region24
        $region23: #{reverse.0} parent=8 // pred_region
          %s26 = ssub.s32 2, 1
          loop: start=0, step=1, limit=1
          $region25: #{reverse.0} parent=23 // loop_pre_header
            _
          $region26: #{reverse.0} parent=23 // loop_header
            %s28 = sphi 0, %s32
            %p29 = scmp.ge.s32.totalorder %s28, 1
            %s33 = sphi %s0, %s0
            %s34 = sphi [#allocation1], [#allocation1]
          $region27: #{reverse.0} parent=23 // loop_header_branch
            %31 = sbr.rel (%p29) target = $region31
          $region28: #{reverse.0} parent=23 // loop_body
            %v35 = vld [vmem:[%s33] sm:%s26]
            %36 = vst [vmem:[%s34] sm:%s26] %v35
          $region29: #{reverse.0} parent=23 // loop_footer
            %s32 = sadd.s32 1, %s28
          $region30: #{reverse.0} parent=23 // loop_footer_branch
            %27 = sbr.rel target = $region26
          $region31: #{reverse.0} parent=23 // loop_exit
            _
        $region24: #{reverse.0} parent=8 // pred_fallthru
          _
      $region9: #{reverse.0} parent=4 // pred_fallthru
        _
      // Predicated region
      $region10: #{reverse.0} parent=4 // pred_check
        _
      $region11: #{reverse.0} parent=4 // pred_check_branch
        %10 = sbr.rel (0) target = $region13
      $region12: #{reverse.0} parent=4 // pred_region
        %s12 = ssub.s32 2, 1
        loop: start=0, step=1, limit=1
        $region14: #{reverse.0} parent=12 // loop_pre_header
          _
        $region15: #{reverse.0} parent=12 // loop_header
          %s14 = sphi 0, %s18
          %p15 = scmp.ge.s32.totalorder %s14, 1
          %s19 = sphi %s0, %s0
          %s20 = sphi [#allocation1], [#allocation1]
        $region16: #{reverse.0} parent=12 // loop_header_branch
          %17 = sbr.rel (%p15) target = $region20
        $region17: #{reverse.0} parent=12 // loop_body
          %v21 = vld [vmem:[%s19] sm:%s12]
          %22 = vst [vmem:[%s20] sm:%s12] %v21
        $region18: #{reverse.0} parent=12 // loop_footer
          %s18 = sadd.s32 1, %s14
        $region19: #{reverse.0} parent=12 // loop_footer_branch
          %13 = sbr.rel target = $region15
        $region20: #{reverse.0} parent=12 // loop_exit
          _
      $region13: #{reverse.0} parent=4 // pred_fallthru
        _
    $region5: #{reverse.0} parent=1 // pred_fallthru
      _
    %37 = vnop
    %s39 = sshll.u32 1, 1
    %s40 = ssub.s32 %s39, 1
    %v41 = vld [vmem:[#allocation1] sm:%s40]
    %42 = vst [vmem:[#allocation0] sm:%s40] %v41
    %v43 = vld [vmem:[#allocation0] sm:$0xff]
    %44 = vperm.xlu0 %4, %v43
    %v45 = vpop.permute.xlu0 %44
    %46 = vst [vmem:[#allocation2] sm:$0xff] %v45
    %s48 = sshll.u32 1, 1
    %s49 = ssub.s32 %s48, 1
    %v51 = vld [vmem:[#allocation2] sm:%s49]
    %s52 = sshll.u32 1, 1
    %s53 = ssub.s32 %s52, 1
    %54 = vst [vmem:[#allocation3] sm:%s53] %v51
    // Predicated region
    $region32: #{reverse.0} parent=1 // pred_check
      _
    $region33: #{reverse.0} parent=1 // pred_check_branch
      %56 = sbr.rel (0) target = $region35
    $region34: #{reverse.0} parent=1 // pred_region
      // Predicated region
      $region36: #{reverse.0} parent=34 // pred_check
        _
      $region37: #{reverse.0} parent=34 // pred_check_branch
        %58 = sbr.rel target = $region39
      $region38: #{reverse.0} parent=34 // pred_region
        // Predicated region
        $region51: #{reverse.0} parent=38 // pred_check
          _
        $region52: #{reverse.0} parent=38 // pred_check_branch
          %74 = sbr.rel (0) target = $region54
        $region53: #{reverse.0} parent=38 // pred_region
          %s76 = ssub.s32 2, 1
          loop: start=0, step=1, limit=1
          $region55: #{reverse.0} parent=53 // loop_pre_header
            _
          $region56: #{reverse.0} parent=53 // loop_header
            %s78 = sphi 0, %s82
            %p79 = scmp.ge.s32.totalorder %s78, 1
            %s83 = sphi [#allocation3], [#allocation3]
            %s84 = sphi %s1, %s1
          $region57: #{reverse.0} parent=53 // loop_header_branch
            %81 = sbr.rel (%p79) target = $region61
          $region58: #{reverse.0} parent=53 // loop_body
            %v85 = vld [vmem:[%s83] sm:%s76]
            %86 = vst [vmem:[%s84] sm:%s76] %v85
          $region59: #{reverse.0} parent=53 // loop_footer
            %s82 = sadd.s32 1, %s78
          $region60: #{reverse.0} parent=53 // loop_footer_branch
            %77 = sbr.rel target = $region56
          $region61: #{reverse.0} parent=53 // loop_exit
            _
        $region54: #{reverse.0} parent=38 // pred_fallthru
          _
      $region39: #{reverse.0} parent=34 // pred_fallthru
        _
      // Predicated region
      $region40: #{reverse.0} parent=34 // pred_check
        _
      $region41: #{reverse.0} parent=34 // pred_check_branch
        %60 = sbr.rel (0) target = $region43
      $region42: #{reverse.0} parent=34 // pred_region
        %s62 = ssub.s32 2, 1
        loop: start=0, step=1, limit=1
        $region44: #{reverse.0} parent=42 // loop_pre_header
          _
        $region45: #{reverse.0} parent=42 // loop_header
          %s64 = sphi 0, %s68
          %p65 = scmp.ge.s32.totalorder %s64, 1
          %s69 = sphi [#allocation3], [#allocation3]
          %s70 = sphi %s1, %s1
        $region46: #{reverse.0} parent=42 // loop_header_branch
          %67 = sbr.rel (%p65) target = $region50
        $region47: #{reverse.0} parent=42 // loop_body
          %v71 = vld [vmem:[%s69] sm:%s62]
          %72 = vst [vmem:[%s70] sm:%s62] %v71
        $region48: #{reverse.0} parent=42 // loop_footer
          %s68 = sadd.s32 1, %s64
        $region49: #{reverse.0} parent=42 // loop_footer_branch
          %63 = sbr.rel target = $region45
        $region50: #{reverse.0} parent=42 // loop_exit
          _
      $region43: #{reverse.0} parent=34 // pred_fallthru
        _
    $region35: #{reverse.0} parent=1 // pred_fallthru
      _
    %87 = vnop

// kernel: layered_extractor_forward.1
$region0: #{layered_extractor_forward.1}
  #allocation0 [shape = 'u32[]', space=smem, size = 0x4, offset = 0x4, fixed_abs, tag = 'smem constant byte address 0x4 - core index']
  #allocation1 [shape = 'u32[144,128]{1,0:T(1,128)}', space=vmem, size = 0x12000, scoped, tag = 'internal scratch']
  %s0 = inlined_call_operand.vmem [shape: f32[4], index: 0, kind: input, shape index: {}]
  %s1 = inlined_call_operand.vmem [shape: f32[8,128], index: 1, kind: input, shape index: {}]
  %s2 = inlined_call_operand.vmem [shape: f32[8,128], index: 2, kind: input, shape index: {}]
  %s3 = inlined_call_operand.vmem [shape: f32[8,128], index: 3, kind: input, shape index: {}]
  %s4 = inlined_call_operand.vmem [shape: f32[1,2,8,128], index: 4, kind: output, shape index: {}]
  %s5 = sld [smem:[#allocation0]]
  $region30: #{layered_extractor_forward.1} parent=0
    _
  %s7 = ssub.s32 1, %s5
  %s8 = scalar_select 0, %s7, %s5
  $region1: #{layered_extractor_forward.1} parent=0
    #allocation2 [shape = 'u8[512]{0}', space=smem, size = 0x200, scoped, tag = 'input window, operand 0, single buffered']
    #allocation3 [shape = 's32[1]{0}', space=sflag, size = 0x4, scoped, tag = 'scoped memory for layered_extractor_forward.1']
    %9 = vsyncpa [#allocation3], 0
    // Predicated region
    $region2: #{layered_extractor_forward.1} parent=1 // pred_check
      _
    $region3: #{layered_extractor_forward.1} parent=1 // pred_check_branch
      %11 = sbr.rel (0) target = $region5
    $region4: #{layered_extractor_forward.1} parent=1 // pred_region
      %s13 = ssub.s32 16, 16
      %14 = vsyncadd [#allocation3], %s13
      %s16 = sshll.u32 %s0, 4
      %s17 = int_to_ptr.vmem [resolvable:$true] %s16
      %19 = dma.vmem_to_smem %s17, 16, [#allocation2], [#allocation3]
    $region5: #{layered_extractor_forward.1} parent=1 // pred_fallthru
      _
    // Predicated region
    $region6: #{layered_extractor_forward.1} parent=1 // pred_check
      _
    $region7: #{layered_extractor_forward.1} parent=1 // pred_check_branch
      %21 = sbr.rel (0) target = $region9
    $region8: #{layered_extractor_forward.1} parent=1 // pred_region
      _
    $region9: #{layered_extractor_forward.1} parent=1 // pred_fallthru
      _
    // Predicated region
    $region10: #{layered_extractor_forward.1} parent=1 // pred_check
      _
    $region11: #{layered_extractor_forward.1} parent=1 // pred_check_branch
      %23 = sbr.rel (0) target = $region13
    $region12: #{layered_extractor_forward.1} parent=1 // pred_region
      _
    $region13: #{layered_extractor_forward.1} parent=1 // pred_fallthru
      _
    // Predicated region
    $region14: #{layered_extractor_forward.1} parent=1 // pred_check
      _
    $region15: #{layered_extractor_forward.1} parent=1 // pred_check_branch
      %25 = sbr.rel (0) target = $region17
    $region16: #{layered_extractor_forward.1} parent=1 // pred_region
      _
    $region17: #{layered_extractor_forward.1} parent=1 // pred_fallthru
      _
    // Predicated region
    $region18: #{layered_extractor_forward.1} parent=1 // pred_check
      _
    $region19: #{layered_extractor_forward.1} parent=1 // pred_check_branch
      %27 = sbr.rel (0) target = $region21
    $region20: #{layered_extractor_forward.1} parent=1 // pred_region
      %28 = dma.done [#allocation3], 16
    $region21: #{layered_extractor_forward.1} parent=1 // pred_fallthru
      _
    %29 = sfence
    %v30 = vld [vmem:[%s1] sm:$0xff]
    %v31 = vld [vmem:[%s2] sm:$0xff]
    %v32 = vld [vmem:[%s3] sm:$0xff]
    %s33 = smul.u32 0, 4
    %s34 = sld [smem:[#allocation2 + %s33]]
    %s35 = sadd.s32 %s33, 1
    %s36 = sld [smem:[#allocation2 + %s35]]
    %s37 = sadd.s32 %s33, 2
    %s38 = sld [smem:[#allocation2 + %s37]]
    %s39 = sadd.s32 %s33, 3
    %s40 = sld [smem:[#allocation2 + %s39]]
    %v41 = vsub.f32 0.0, %v30
    %v42 = vstv %s34
    %v43 = vmul.f32 %v41, %v42
    %v44 = vmul.f32 %v43, 1.442695
    %v45 = vpow.pop %v44
    %v46 = vstv %s36
    %v47 = vmul.f32 %v30, %v46
    %v48 = vand.u32 2147483647, %v47
    %vm49 = vcmp.le.f32.partialorder %v48, 0.7853982
    %vm50 = vcmp.lt.s32.totalorder %v47, 0
    %v51 = vand.u32 %v47, 2139095040
    %v52 = vshrl.u32 %v51, 23
    %v53 = vsub.s32 %v52, 127
    %v54 = vand.u32 2147483647, %v47
    %v55 = vand.u32 %v54, 8388607
    %v56 = vor.u32 %v55, 8388608
    %v57 = vsub.s32 0, %v56
    %v58 = vadd.s32 %v53, 1
    %vm59 = vcmp.gt.s32.totalorder %v58, 0
    %v60 = vsel %vm59, %v58, 0
    %v61 = vshrl.u32 %v60, 5
    %v62 = vand.u32 %v60, 31
    %v63 = vsub.s32 32, %v62
    %v64 = vshrl.u32 683565275, %v63
    %v65 = vshll.u32 683565275, %v62
    %v66 = vshrl.u32 2475754826, %v63
    %v67 = vor.u32 %v65, %v66
    %v68 = vshll.u32 2475754826, %v62
    %v69 = vshrl.u32 2131351028, %v63
    %v70 = vor.u32 %v68, %v69
    %v71 = vshll.u32 2131351028, %v62
    %v72 = vshrl.u32 2102212464, %v63
    %v73 = vor.u32 %v71, %v72
    %v74 = vshll.u32 2102212464, %v62
    %v75 = vshrl.u32 920167782, %v63
    %v76 = vor.u32 %v74, %v75
    %v77 = vshll.u32 920167782, %v62
    %v78 = vshrl.u32 1326507024, %v63
    %v79 = vor.u32 %v77, %v78
    %vm80 = vcmp.lt.s32.totalorder %v61, 1
    %vm81 = vcmp.lt.s32.totalorder %v61, 2
    %vm82 = vcmp.lt.s32.totalorder %v61, 3
    %vm83 = vcmp.lt.s32.totalorder %v61, 4
    %v84 = vsel %vm80, %v64, %v67
    %v85 = vsel %vm83, %v73, 2102212464
    %v86 = vsel %vm82, %v70, %v85
    %v87 = vsel %vm81, %v84, %v86
    %v88 = vsel %vm80, %v67, %v70
    %v89 = vsel %vm83, %v76, 920167782
    %v90 = vsel %vm82, %v73, %v89
    %v91 = vsel %vm81, %v88, %v90
    %v92 = vsel %vm80, %v70, %v73
    %v93 = vsel %vm83, %v79, 1326507024
    %v94 = vsel %vm82, %v76, %v93
    %v95 = vsel %vm81, %v92, %v94
    %v96 = vshll.u32 %v56, 8
    %v97 = vmul.u32.u64.compose %v96, %v95
    %v98 = vextract.low.u32 %v97
    %v99 = vextract.high.u32 %v97
    %v100 = vmul.u32.u64.compose %v96, %v91
    %v101 = vextract.low.u32 %v100
    %v102 = vextract.high.u32 %v100
    %v103 = vmul.u32 %v96, %v87
    %v104 = vadd.s32 %v99, %v101
    %vm105 = vc.u32 %v99, %v101
    %v106 = vadd.s32 %v102, 1
    %v107 = vsel %vm105, %v106, %v102
    %v108 = vadd.s32 %v103, %v107
    %v109 = vadd.s32 %v108, 536870912
    %v110 = vshrl.u32 %v109, 30
    %v111 = vshll.u32 %v110, 30
    %v112 = vsub.s32 %v108, %v111
    %vm113 = vcmp.lt.s32.totalorder %v112, 0
    %v114 = vsub.s32 0, %v112
    %v115 = vsel %vm113, %v114, %v112
    %v116 = vclz %v115
    %v117 = vsub.s32 %v116, 2
    %vm118 = vcmp.gt.s32.totalorder 0, %v117
    %v119 = vsel %vm118, 0, %v117
    %v120 = vsub.s32 32, %v119
    %v121 = vshll.u32 %v112, %v119
    %v122 = vshrl.u32 %v104, %v120
    %v123 = vor.u32 %v121, %v122
    %v124 = vsub.s32 4294967266, %v119
    %v125 = vadd.s32 %v124, 127
    %v126 = vshll.u32 %v125, 23
    %v127 = vor.u32 4788187, %v126
    %v128 = vand.u32 2147483647, %v127
    %v130 = vcvt.s32.f32 %v123
    %v131 = vmul.f32 %v130, %v128
    %v132 = vxor.u32 %v131, 2147483648
    %v133 = vsel %vm50, %v132, %v131
    %v134 = vsub.s32 4, %v110
    %v135 = vsel %vm50, %v134, %v110
    %v136 = vsel %vm49, %v47, %v133
    %v137 = vsel %vm49, 0, %v135
    %v138 = vcosq.f32.pop %v136
    %v139 = vsinq.f32.pop %v136
    %vm140 = vweird.f32 %v47
    %v141 = vand.u32 %v137, 3
    %vm142 = vcmp.lt.s32.totalorder %v141, 2
    %vm143 = vcmp.eq.s32.totalorder %v141, 0
    %v144 = vxor.u32 %v139, 2147483648
    %v145 = vsel %vm143, %v138, %v144
    %vm146 = vcmp.eq.s32.totalorder %v141, 2
    %v147 = vxor.u32 %v138, 2147483648
    %v148 = vsel %vm146, %v147, %v139
    %v149 = vsel %vm142, %v145, %v148
    %v150 = vsel %vm140, nan, %v149
    %v151 = vmul.f32 %v45, %v150
    %v152 = vand.u32 2147483647, %v47
    %vm153 = vcmp.le.f32.partialorder %v152, 0.7853982
    %vm154 = vcmp.lt.s32.totalorder %v47, 0
    %v155 = vand.u32 %v47, 2139095040
    %v156 = vshrl.u32 %v155, 23
    %v157 = vsub.s32 %v156, 127
    %v158 = vand.u32 2147483647, %v47
    %v159 = vand.u32 %v158, 8388607
    %v160 = vor.u32 %v159, 8388608
    %v161 = vsub.s32 0, %v160
    %v162 = vadd.s32 %v157, 1
    %vm163 = vcmp.gt.s32.totalorder %v162, 0
    %v164 = vsel %vm163, %v162, 0
    %v165 = vshrl.u32 %v164, 5
    %v166 = vand.u32 %v164, 31
    %v167 = vsub.s32 32, %v166
    %v168 = vshrl.u32 683565275, %v167
    %v169 = vshll.u32 683565275, %v166
    %v170 = vshrl.u32 2475754826, %v167
    %v171 = vor.u32 %v169, %v170
    %v172 = vshll.u32 2475754826, %v166
    %v173 = vshrl.u32 2131351028, %v167
    %v174 = vor.u32 %v172, %v173
    %v175 = vshll.u32 2131351028, %v166
    %v176 = vshrl.u32 2102212464, %v167
    %v177 = vor.u32 %v175, %v176
    %v178 = vshll.u32 2102212464, %v166
    %v179 = vshrl.u32 920167782, %v167
    %v180 = vor.u32 %v178, %v179
    %v181 = vshll.u32 920167782, %v166
    %v182 = vshrl.u32 1326507024, %v167
    %v183 = vor.u32 %v181, %v182
    %vm184 = vcmp.lt.s32.totalorder %v165, 1
    %vm185 = vcmp.lt.s32.totalorder %v165, 2
    %vm186 = vcmp.lt.s32.totalorder %v165, 3
    %vm187 = vcmp.lt.s32.totalorder %v165, 4
    %v188 = vsel %vm184, %v168, %v171
    %v189 = vsel %vm187, %v177, 2102212464
    %v190 = vsel %vm186, %v174, %v189
    %v191 = vsel %vm185, %v188, %v190
    %v192 = vsel %vm184, %v171, %v174
    %v193 = vsel %vm187, %v180, 920167782
    %v194 = vsel %vm186, %v177, %v193
    %v195 = vsel %vm185, %v192, %v194
    %v196 = vsel %vm184, %v174, %v177
    %v197 = vsel %vm187, %v183, 1326507024
    %v198 = vsel %vm186, %v180, %v197
    %v199 = vsel %vm185, %v196, %v198
    %v200 = vshll.u32 %v160, 8
    %v201 = vmul.u32.u64.compose %v200, %v199
    %v202 = vextract.low.u32 %v201
    %v203 = vextract.high.u32 %v201
    %v204 = vmul.u32.u64.compose %v200, %v195
    %v205 = vextract.low.u32 %v204
    %v206 = vextract.high.u32 %v204
    %v207 = vmul.u32 %v200, %v191
    %v208 = vadd.s32 %v203, %v205
    %vm209 = vc.u32 %v203, %v205
    %v210 = vadd.s32 %v206, 1
    %v211 = vsel %vm209, %v210, %v206
    %v212 = vadd.s32 %v207, %v211
    %v213 = vadd.s32 %v212, 536870912
    %v214 = vshrl.u32 %v213, 30
    %v215 = vshll.u32 %v214, 30
    %v216 = vsub.s32 %v212, %v215
    %vm217 = vcmp.lt.s32.totalorder %v216, 0
    %v218 = vsub.s32 0, %v216
    %v219 = vsel %vm217, %v218, %v216
    %v220 = vclz %v219
    %v221 = vsub.s32 %v220, 2
    %vm222 = vcmp.gt.s32.totalorder 0, %v221
    %v223 = vsel %vm222, 0, %v221
    %v224 = vsub.s32 32, %v223
    %v225 = vshll.u32 %v216, %v223
    %v226 = vshrl.u32 %v208, %v224
    %v227 = vor.u32 %v225, %v226
    %v228 = vsub.s32 4294967266, %v223
    %v229 = vadd.s32 %v228, 127
    %v230 = vshll.u32 %v229, 23
    %v231 = vor.u32 4788187, %v230
    %v232 = vand.u32 2147483647, %v231
    %v234 = vcvt.s32.f32 %v227
    %v235 = vmul.f32 %v234, %v232
    %v236 = vxor.u32 %v235, 2147483648
    %v237 = vsel %vm154, %v236, %v235
    %v238 = vsub.s32 4, %v214
    %v239 = vsel %vm154, %v238, %v214
    %v240 = vsel %vm153, %v47, %v237
    %v241 = vsel %vm153, 0, %v239
    %v242 = vcosq.f32.pop %v240
    %v243 = vsinq.f32.pop %v240
    %vm244 = vweird.f32 %v47
    %v245 = vadd.s32 %v241, 3
    %v246 = vand.u32 %v245, 3
    %vm247 = vcmp.lt.s32.totalorder %v246, 2
    %vm248 = vcmp.eq.s32.totalorder %v246, 0
    %v249 = vxor.u32 %v243, 2147483648
    %v250 = vsel %vm248, %v242, %v249
    %vm251 = vcmp.eq.s32.totalorder %v246, 2
    %v252 = vxor.u32 %v242, 2147483648
    %v253 = vsel %vm251, %v252, %v243
    %v254 = vsel %vm247, %v250, %v253
    %v255 = vsel %vm244, nan, %v254
    %v256 = vmul.f32 %v45, %v255
    %v257 = vstv %s38
    %v258 = vmul.f32 %v257, %v151
    %v259 = vstv %s40
    %v260 = vmul.f32 %v259, %v256
    %v261 = vsub.f32 %v258, %v260
    %v262 = vmul.f32 %v257, %v256
    %v263 = vmul.f32 %v259, %v151
    %v264 = vadd.f32 %v262, %v263
    %v265 = vmul.f32 %v31, %v261
    %v266 = vmul.f32 %v32, %v264
    %v267 = vsub.f32 %v265, %v266
    %268 = vst [vmem:[%s4] sm:$0xff] %v267
    %v269 = vmul.f32 %v31, %v264
    %v270 = vmul.f32 %v32, %v261
    %v271 = vadd.f32 %v269, %v270
    %s272 = scalar_lea.vmem %s4, 8
    %273 = vst [vmem:[%s272] sm:$0xff] %v271
    // Predicated region
    $region22: #{layered_extractor_forward.1} parent=1 // pred_check
      _
    $region23: #{layered_extractor_forward.1} parent=1 // pred_check_branch
      %275 = sbr.rel (0) target = $region25
    $region24: #{layered_extractor_forward.1} parent=1 // pred_region
      _
    $region25: #{layered_extractor_forward.1} parent=1 // pred_fallthru
      _
    // Predicated region
    $region26: #{layered_extractor_forward.1} parent=1 // pred_check
      _
    $region27: #{layered_extractor_forward.1} parent=1 // pred_check_branch
      %277 = sbr.rel (0) target = $region29
    $region28: #{layered_extractor_forward.1} parent=1 // pred_region
      _
    $region29: #{layered_extractor_forward.1} parent=1 // pred_fallthru
      _
    %278 = vsyncpa [#allocation3], 1

</llo_original>
